<compile_context>
chip_gen: v6e
topology: v6e:2x2x1
jax: 0.10.0
libtpu: 0.0.40
codegen_flags: <defaults>
</compile_context>

<pallas_src>
import jax
import jax.numpy as jnp
import numpy as np
from jax import lax
from jax.experimental import pallas as pl
from jax.experimental.pallas import tpu as pltpu

W_SUB = 8                            # sublane-aligned weight-slab rows (row 0 is live)
_VMEM_BUDGET = 24 * 1024 * 1024      # double-buffered working-set target (v7x-safe)
_VMEM_LIMIT = 32 * 1024 * 1024       # >= default scoped limit on v5e/v6e/v7x, <= physical
_MAX_TB = 16 * 1024                  # keep per-step tiles in a well-trodden size regime
_SMALL_B = 256                       # below this, run a single full-batch block


def _value_kernel(x_ref, w_ref, b_ref, out_ref):
    """out[0, b] = sum_k w[0, k] * x[b, k] + bias  (batch on the lane axis)."""
    # (W_SUB, IN) x (TB, IN), contracted over IN -> (W_SUB, TB).
    # Same MXU dimension-numbers pattern as attention's q @ k.T.
    prod = lax.dot_general(
        w_ref[...], x_ref[...],
        dimension_numbers=(((1,), (1,)), ((), ())),
        preferred_element_type=jnp.float32,
    )
    # Row 0 carries the value; rows 1..7 are zero weight padding.  Bias is an
    # SMEM f32 scalar broadcast into the add.
    out_ref[...] = prod[0:1, :] + b_ref[0]


def _round_up(x, m):
    return (x + m - 1) // m * m


def _pick_batch_tile(batch, in_dim, x_itemsize):
    """Pick TB from a VMEM budget + v7x dual-TC load-balance constraint."""
    if batch <= _SMALL_B:
        return batch  # single block; full-array block dims are always legal
    # Per-row, double-buffered VMEM bytes: x tile + f32 out tile.
    row_bytes = 2 * in_dim * x_itemsize + 2 * 4
    tb_vmem = max(128, (_VMEM_BUDGET // row_bytes) // 128 * 128)
    # Keep >= ~4 grid steps so v7x's second TensorCore gets work.
    tb_multi_tc = _round_up(pl.cdiv(batch, 4), 128)
    return max(128, min(tb_vmem, tb_multi_tc, _MAX_TB))


@jax.jit
def value_net_forward(x, w_slab, b):
    """ValueNet.forward: value = x @ W.T + b, returned as (B, 1)."""
    B, IN = x.shape
    TB = _pick_batch_tile(B, IN, x.dtype.itemsize)
    grid = (pl.cdiv(B, TB),)

    cost = pl.CostEstimate(
        flops=2 * B * IN,
        transcendentals=0,
        bytes_accessed=(x.size * x.dtype.itemsize
                        + w_slab.size * w_slab.dtype.itemsize
                        + b.size * b.dtype.itemsize
                        + B * 4),
    )

    out = pl.pallas_call(
        _value_kernel,
        out_shape=jax.ShapeDtypeStruct((1, B), jnp.float32),
        grid=grid,
        in_specs=[
            # Activations, tiled over the batch axis.
            pl.BlockSpec((TB, IN), lambda i: (i, 0)),
            # Weight slab, resident across all grid steps.
            pl.BlockSpec((W_SUB, IN), lambda i: (0, 0)),
            # Bias scalar in SMEM.
            pl.BlockSpec(memory_space=pltpu.MemorySpace.SMEM),
        ],
        # Transposed, lane-dense value row: batch on the 128-lane axis.
        out_specs=pl.BlockSpec((1, TB), lambda i: (0, i)),
        compiler_params=pltpu.CompilerParams(
            dimension_semantics=("parallel",),
            vmem_limit_bytes=_VMEM_LIMIT,
        ),
        cost_estimate=cost,
    )(x, w_slab, b)

    # Free XLA reshape: (1, B) -> (B, 1).
    return out.reshape(B, 1)


def init_params(key, input_dim, dtype=jnp.float32):
    """Mirror nn.Linear(input_dim, 1) init and pack into the kernel layout."""
    k_w, k_b = jax.random.split(key)
    bound = 1.0 / np.sqrt(input_dim)
    w = jax.random.uniform(k_w, (1, input_dim), jnp.float32, -bound, bound)  # torch (out, in)
    b = jax.random.uniform(k_b, (1,), jnp.float32, -bound, bound)
    # Sublane-aligned weight slab: row 0 = weight vector, rows 1..7 zero.
    w_slab = jnp.zeros((W_SUB, input_dim), jnp.float32).at[0, :].set(w[0]).astype(dtype)
    return {"w": w, "b": b, "w_slab": w_slab, "b_kernel": b.astype(jnp.float32)}


def _reference_forward(x, params):
    """Pure-JAX reference matching the PyTorch module exactly (f32)."""
    return x.astype(jnp.float32) @ params["w"].T + params["b"]


if __name__ == "__main__":
    key = jax.random.PRNGKey(0)
    k_x, k_p, k_x2 = jax.random.split(key, 3)

    # ---- tiny demo shape (single-block path), f32 --------------------------
    B, IN = 2, 32
    params = init_params(k_p, IN)
    x = jax.random.normal(k_x, (B, IN), jnp.float32)

    value = jax.block_until_ready(
        value_net_forward(x, params["w_slab"], params["b_kernel"]))
    ref = _reference_forward(x, params)
    assert value.shape == (B, 1)
    # Tolerance accommodates possible bf16 MXU passes for f32 operands; exact
    # f32 parity at large IN would additionally set precision=HIGHEST upstream.
    np.testing.assert_allclose(np.asarray(value), np.asarray(ref), atol=5e-3)

    # ---- tiled path: multi-step grid + partial tail block, f32 -------------
    B2 = 520
    x2 = jax.random.normal(k_x2, (B2, IN), jnp.float32)
    value2 = jax.block_until_ready(
        value_net_forward(x2, params["w_slab"], params["b_kernel"]))
    ref2 = _reference_forward(x2, params)
    assert value2.shape == (B2, 1)
    np.testing.assert_allclose(np.asarray(value2), np.asarray(ref2), atol=5e-3)

    # ---- bf16 activations/weights (read-bandwidth path) --------------------
    params_bf16 = init_params(k_p, IN, dtype=jnp.bfloat16)
    x_bf16 = x.astype(jnp.bfloat16)
    value_bf16 = jax.block_until_ready(
        value_net_forward(x_bf16, params_bf16["w_slab"], params_bf16["b_kernel"]))
    assert value_bf16.shape == (B, 1)
    np.testing.assert_allclose(np.asarray(value_bf16), np.asarray(ref), atol=5e-2)

    print("KERNEL_OK")
</pallas_src>

<mosaic_0001>
module attributes {stable_mosaic.version = 11 : i64} {
  func.func @_value_kernel(%arg0: i32, %arg1: memref<2x32xf32, #tpu.memory_space<vmem>>, %arg2: memref<8x32xf32, #tpu.memory_space<vmem>>, %arg3: memref<1xf32, #tpu.memory_space<smem>>, %arg4: memref<1x2xf32, #tpu.memory_space<vmem>>) attributes {dimension_semantics = [#tpu.dimension_semantics<parallel>], iteration_bounds = array<i64: 1>, scalar_prefetch = 0 : i64, scratch_operands = 0 : i64, tpu.core_type = #tpu.core_type<tc>, window_params = [{transform_indices = @transform_0, window_bounds = array<i64: 2, 32>}, {pipeline_mode = #tpu.pipeline_mode<synchronous>, transform_indices = @transform_1, window_bounds = array<i64: 8, 32>}, {transform_indices = @transform_2, window_bounds = array<i64: 1>}, {transform_indices = @transform_3, window_bounds = array<i64: 1, 2>}]} {
    %c0 = arith.constant 0 : index
    %c0_0 = arith.constant 0 : index
    %0 = vector.load %arg2[%c0, %c0_0] : memref<8x32xf32, #tpu.memory_space<vmem>>, vector<8x32xf32>
    %c0_1 = arith.constant 0 : index
    %c0_2 = arith.constant 0 : index
    %1 = vector.load %arg1[%c0_1, %c0_2] : memref<2x32xf32, #tpu.memory_space<vmem>>, vector<2x32xf32>
    %cst = arith.constant dense<0.000000e+00> : vector<8x2xf32>
    %2 = tpu.matmul %0, %1, %cst {dimension_numbers = #tpu.dot_dimension_numbers<[1], [1], [0], [0], [0, 0, 1, 0], [], []>} : vector<8x32xf32>, vector<2x32xf32>, vector<8x2xf32> -> vector<8x2xf32>
    %3 = vector.extract_strided_slice %2 {offsets = [0, 0], sizes = [1, 2], strides = [1, 1]} : vector<8x2xf32> to vector<1x2xf32>
    %c0_3 = arith.constant 0 : index
    %4 = memref.load %arg3[%c0_3] : memref<1xf32, #tpu.memory_space<smem>>
    %5 = vector.broadcast %4 : f32 to vector<1x2xf32>
    %6 = arith.addf %3, %5 : vector<1x2xf32>
    %c0_4 = arith.constant 0 : index
    %c0_5 = arith.constant 0 : index
    %7 = vector.load %arg4[%c0_4, %c0_5] : memref<1x2xf32, #tpu.memory_space<vmem>>, vector<1x2xf32>
    tpu.vector_store %arg4[%c0_4, %c0_5], %6 {strides = array<i32>} : memref<1x2xf32, #tpu.memory_space<vmem>>, vector<1x2xf32>,
    return
  }
  func.func @transform_0(%arg0: i32) -> (i32, i32) {
    %c0_i32 = arith.constant 0 : i32
    %c0_i32_0 = arith.constant 0 : i32
    return %arg0, %c0_i32 : i32, i32
  }
  func.func @transform_1(%arg0: i32) -> (i32, i32) {
    %c0_i32 = arith.constant 0 : i32
    %c0_i32_0 = arith.constant 0 : i32
    %c0_i32_1 = arith.constant 0 : i32
    return %c0_i32, %c0_i32_0 : i32, i32
  }
  func.func @transform_2(%arg0: i32) -> i32 {
    %c0_i32 = arith.constant 0 : i32
    %c0_i32_0 = arith.constant 0 : i32
    return %c0_i32 : i32
  }
  func.func @transform_3(%arg0: i32) -> (i32, i32) {
    %c0_i32 = arith.constant 0 : i32
    %c0_i32_0 = arith.constant 0 : i32
    return %c0_i32, %arg0 : i32, i32
  }
}

</mosaic_0001>

<llo_original>
// kernel: value_net_forward.1
$region0: #{value_net_forward.1}
  #allocation0 [shape = 'u32[]', space=smem, size = 0x4, offset = 0x4, fixed_abs, tag = 'smem constant byte address 0x4 - core index']
  #allocation1 [shape = 'u32[144,128]{1,0:T(1,128)}', space=vmem, size = 0x12000, scoped, tag = 'internal scratch']
  #allocation2 [shape = 'f32[1]{0:T(128)S(6)}', space=smem, size = 0x200, scoped, tag = 'scoped memory for value_net_forward.1']
  %s0 = inlined_call_operand.vmem [shape: f32[2,32], index: 0, kind: input, shape index: {}]
  %s1 = inlined_call_operand.hbm [shape: f32[8,32], index: 1, kind: input, shape index: {}]
  %s2 = inlined_call_operand.<no memory space> [shape: f32[1], index: 2, kind: input, shape index: {}]
  %s3 = inlined_call_operand.hbm [shape: f32[1,2], index: 3, kind: output, shape index: {}]
  %s4 = sld [smem:[#allocation0]]
  $region26: #{value_net_forward.1} parent=0
    _
  %s6 = ssub.s32 1, %s4
  %s7 = scalar_select 0, %s6, %s4
  %8 = sst [smem:[#allocation2]] %s2
  $region1: #{value_net_forward.1} parent=0
    #allocation3 [shape = 'u8[4096]{0}', space=vmem, size = 0x1000, scoped, tag = 'input window, operand 1, single buffered']
    #allocation4 [shape = 's32[1]{0}', space=sflag, size = 0x4, scoped, tag = 'scoped memory for value_net_forward.1']
    #allocation5 [shape = 's32[1]{0}', space=sflag, size = 0x4, scoped, tag = 'scoped memory for value_net_forward.1']
    #allocation6 [shape = 'u8[512]{0}', space=vmem, size = 0x400, scoped, tag = 'output window, operand 0, single buffered']
    %9 = vsyncpa [#allocation4], 0
    %10 = vsyncpa [#allocation5], 0
    // Predicated region
    $region2: #{value_net_forward.1} parent=1 // pred_check
      _
    $region3: #{value_net_forward.1} parent=1 // pred_check_branch
      %12 = sbr.rel (0) target = $region5
    $region4: #{value_net_forward.1} parent=1 // pred_region
      _
    $region5: #{value_net_forward.1} parent=1 // pred_fallthru
      _
    // Predicated region
    $region6: #{value_net_forward.1} parent=1 // pred_check
      _
    $region7: #{value_net_forward.1} parent=1 // pred_check_branch
      %14 = sbr.rel (0) target = $region9
    $region8: #{value_net_forward.1} parent=1 // pred_region
      %s16 = ssub.s32 128, 128
      %17 = vsyncadd [#allocation4], %s16
      %s19 = sshll.u32 [#allocation3], 4
      %s20 = int_to_ptr.vmem [resolvable:$true] %s19
      %22 = dma.hbm_to_vmem [thread:$0]  %s1, 128, %s20, [#allocation4]
    $region9: #{value_net_forward.1} parent=1 // pred_fallthru
      _
    // Predicated region
    $region10: #{value_net_forward.1} parent=1 // pred_check
      _
    $region11: #{value_net_forward.1} parent=1 // pred_check_branch
      %24 = sbr.rel (0) target = $region13
    $region12: #{value_net_forward.1} parent=1 // pred_region
      _
    $region13: #{value_net_forward.1} parent=1 // pred_fallthru
      _
    // Predicated region
    $region14: #{value_net_forward.1} parent=1 // pred_check
      _
    $region15: #{value_net_forward.1} parent=1 // pred_check_branch
      %26 = sbr.rel (0) target = $region17
    $region16: #{value_net_forward.1} parent=1 // pred_region
      %27 = dma.done [#allocation4], 128
    $region17: #{value_net_forward.1} parent=1 // pred_fallthru
      _
    %v28 = vld [vmem:[#allocation3] sm:$0xff]
    %v29 = vld [vmem:[%s0] sm:$0x3]
    %vm30 = vcmask 261120
    %v32 = vsel %vm30, %v28, 0
    %v35 = vsel %vm30, %v29, 0
    %37 = vmatprep.subr.mxu0 0.0
    %38 = vmatpush1.xpose.msra.mxu0 0.0
    %39 = vmatprep.subr.mxu0 0.0
    %40 = vmatpush1.xpose.msra.mxu0 0.0
    %41 = vmatprep.subr.mxu0 0.0
    %42 = vmatpush1.xpose.msra.mxu0 0.0
    %43 = vmatprep.subr.mxu0 0.0
    %44 = vmatpush1.xpose.msra.mxu0 0.0
    %45 = vmatprep.subr.mxu0 0.0
    %46 = vmatpush1.xpose.msra.mxu0 0.0
    %47 = vmatprep.subr.mxu0 0.0
    %48 = vmatpush1.xpose.msra.mxu0 0.0
    %49 = vmatprep.subr.mxu0 0.0
    %50 = vmatpush1.xpose.msra.mxu0 0.0
    %51 = vmatprep.subr.mxu0 0.0
    %52 = vmatpush1.xpose.msra.mxu0 0.0
    %53 = vmatprep.subr.mxu0 0.0
    %54 = vmatpush1.xpose.msra.mxu0 0.0
    %55 = vmatprep.subr.mxu0 0.0
    %56 = vmatpush1.xpose.msra.mxu0 0.0
    %57 = vmatprep.subr.mxu0 0.0
    %58 = vmatpush1.xpose.msra.mxu0 0.0
    %59 = vmatprep.subr.mxu0 0.0
    %60 = vmatpush1.xpose.msra.mxu0 0.0
    %61 = vmatprep.subr.mxu0 0.0
    %62 = vmatpush1.xpose.msra.mxu0 0.0
    %63 = vmatprep.subr.mxu0 0.0
    %64 = vmatpush1.xpose.msra.mxu0 0.0
    %65 = vmatprep.subr.mxu0 0.0
    %66 = vmatpush1.xpose.msra.mxu0 0.0
    %67 = vmatprep.subr.mxu0 0.0
    %68 = vmatpush1.xpose.msra.mxu0 %v35
    %69 = vmatprep.subr.mxu0 0.0
    %70 = vmatpush2.xpose.msra.mxu0 0.0
    %71 = vmatprep.subr.mxu0 0.0
    %72 = vmatpush2.xpose.msra.mxu0 0.0
    %73 = vmatprep.subr.mxu0 0.0
    %74 = vmatpush2.xpose.msra.mxu0 0.0
    %75 = vmatprep.subr.mxu0 0.0
    %76 = vmatpush2.xpose.msra.mxu0 0.0
    %77 = vmatprep.subr.mxu0 0.0
    %78 = vmatpush2.xpose.msra.mxu0 0.0
    %79 = vmatprep.subr.mxu0 0.0
    %80 = vmatpush2.xpose.msra.mxu0 0.0
    %81 = vmatprep.subr.mxu0 0.0
    %82 = vmatpush2.xpose.msra.mxu0 0.0
    %83 = vmatprep.subr.mxu0 0.0
    %84 = vmatpush2.xpose.msra.mxu0 0.0
    %85 = vmatprep.subr.mxu0 0.0
    %86 = vmatpush2.xpose.msra.mxu0 0.0
    %87 = vmatprep.subr.mxu0 0.0
    %88 = vmatpush2.xpose.msra.mxu0 0.0
    %89 = vmatprep.subr.mxu0 0.0
    %90 = vmatpush2.xpose.msra.mxu0 0.0
    %91 = vmatprep.subr.mxu0 0.0
    %92 = vmatpush2.xpose.msra.mxu0 0.0
    %93 = vmatprep.subr.mxu0 0.0
    %94 = vmatpush2.xpose.msra.mxu0 0.0
    %95 = vmatprep.subr.mxu0 0.0
    %96 = vmatpush2.xpose.msra.mxu0 0.0
    %97 = vmatprep.subr.mxu0 0.0
    %98 = vmatpush2.xpose.msra.mxu0 0.0
    %99 = vmatprep.subr.mxu0 0.0
    %100 = vmatpush2.xpose.msra.mxu0 0.0
    %101 = vmatprep.mubr.f32.mxu0 0.0
    %102 = vmatmul.mubr.f32.gmra.mxu0 %v32
    %v103 = vpop.f32.mrf.mxu0
    %v104 = vadd.f32 0.0, %v103
    %v105 = vpop.f32.mrf.mxu0
    %106 = vdwg.mxu0
    %s107 = sld [smem:[#allocation2]]
    %v108 = vstv %s107
    %v109 = vadd.f32 %v104, %v108
    %vm110 = vcmask 8192
    %111 = vst.msk [vmem:[#allocation6] sm:$0x1] %vm110, %v109
    // Predicated region
    $region18: #{value_net_forward.1} parent=1 // pred_check
      _
    $region19: #{value_net_forward.1} parent=1 // pred_check_branch
      %113 = sbr.rel (0) target = $region21
    $region20: #{value_net_forward.1} parent=1 // pred_region
      %s115 = ssub.s32 16, 16
      %116 = vsyncadd [#allocation5], %s115
      %s118 = sshll.u32 [#allocation6], 4
      %s119 = int_to_ptr.vmem [resolvable:$true] %s118
      %121 = dma.vmem_to_hbm [thread:$0]  %s119, 16, %s3, [#allocation5]
    $region21: #{value_net_forward.1} parent=1 // pred_fallthru
      _
    // Predicated region
    $region22: #{value_net_forward.1} parent=1 // pred_check
      _
    $region23: #{value_net_forward.1} parent=1 // pred_check_branch
      %123 = sbr.rel (0) target = $region25
    $region24: #{value_net_forward.1} parent=1 // pred_region
      %124 = dma.done [#allocation5], 16
    $region25: #{value_net_forward.1} parent=1 // pred_fallthru
      _
    %125 = vsyncpa [#allocation4], 1
    %126 = vsyncpa [#allocation5], 1

</llo_original>
